<compile_context>
chip_gen: v5e
topology: v5e:2x2
jax: 0.10.0
libtpu: 0.0.40
codegen_flags: <defaults>
</compile_context>

<pallas_src>
import jax
import jax.numpy as jnp
from jax.experimental import pallas as pl
from jax.experimental.pallas import tpu as pltpu


def _round_up(x, mult):
    return ((x + mult - 1) // mult) * mult


def edge_embedding(h, m, edge_index, W, *, tile_e=256, activation=None,
                   compute_dtype=jnp.bfloat16, out_dtype=None):
    """Pallas equivalent of EdgeEmbedding.forward (Dense with bias=False).

    h:          float32 [num_atoms, atom_features]   atom embeddings
    m:          float32 [num_edges, edge_features]   rbf / edge embedding
    edge_index: int32   [2, num_edges]               (source, target) atom ids
    W:          float32 [2*atom_features + edge_features, out_features]
                dense weight (== torch nn.Linear.weight.T)
    activation: optional elementwise callable fused after the dense layer
                (default None == identity, matching the module default).
    compute_dtype: dtype fed to the MXU (bf16 default; accumulation is f32).
    returns     [num_edges, out_features] in out_dtype (default W.dtype)
    """
    num_atoms, atom_features = h.shape
    n_edges, edge_features = m.shape
    in_features, out_features = W.shape
    assert in_features == 2 * atom_features + edge_features
    assert edge_index.shape == (2, n_edges)
    assert n_edges > 0
    if out_dtype is None:
        out_dtype = W.dtype

    # ---- row gather in the wrapper (XLA gather) -----------------------------
    src = edge_index[0].astype(jnp.int32)
    tgt = edge_index[1].astype(jnp.int32)
    h_s = jnp.take(h, src, axis=0)           # (nEdges, A)
    h_t = jnp.take(h, tgt, axis=0)           # (nEdges, A)
    m_in = m

    # ---- pad contraction dims to lane-dense multiples of 128 ----------------
    a_pad = _round_up(atom_features, 128)
    e_pad = _round_up(edge_features, 128)
    W_s = W[:atom_features]
    W_t = W[atom_features:2 * atom_features]
    W_m = W[2 * atom_features:]
    if a_pad != atom_features:
        h_s = jnp.pad(h_s, ((0, 0), (0, a_pad - atom_features)))
        h_t = jnp.pad(h_t, ((0, 0), (0, a_pad - atom_features)))
        W_s = jnp.pad(W_s, ((0, a_pad - atom_features), (0, 0)))
        W_t = jnp.pad(W_t, ((0, a_pad - atom_features), (0, 0)))
    if e_pad != edge_features:
        m_in = jnp.pad(m_in, ((0, 0), (0, e_pad - edge_features)))
        W_m = jnp.pad(W_m, ((0, e_pad - edge_features), (0, 0)))

    # ---- edge tiling: 8-aligned tile, aim for ~4 grid steps -----------------
    tile_e = max(8, (int(tile_e) // 8) * 8)
    tile_cap = _round_up(max(1, pl.cdiv(n_edges, 4)), 8)
    tile_e = min(tile_e, max(8, tile_cap))
    n_pad = _round_up(n_edges, tile_e)
    pad = n_pad - n_edges
    if pad:
        h_s = jnp.pad(h_s, ((0, pad), (0, 0)))     # padded rows are all zero
        h_t = jnp.pad(h_t, ((0, pad), (0, 0)))
        m_in = jnp.pad(m_in, ((0, pad), (0, 0)))

    # ---- narrow MXU feed (f32 accumulation inside the kernel) ---------------
    h_s = h_s.astype(compute_dtype)
    h_t = h_t.astype(compute_dtype)
    m_in = m_in.astype(compute_dtype)
    W_s = W_s.astype(compute_dtype)
    W_t = W_t.astype(compute_dtype)
    W_m = W_m.astype(compute_dtype)

    def kernel(hs_ref, ht_ref, m_ref, ws_ref, wt_ref, wm_ref, o_ref):
        # Fused dense: concat([h_s, h_t, m]) @ W
        #            == h_s @ W_s + h_t @ W_t + m @ W_m   (f32 accumulation)
        out = jnp.dot(hs_ref[...], ws_ref[...],
                      preferred_element_type=jnp.float32)
        out = out + jnp.dot(ht_ref[...], wt_ref[...],
                            preferred_element_type=jnp.float32)
        out = out + jnp.dot(m_ref[...], wm_ref[...],
                            preferred_element_type=jnp.float32)
        if activation is not None:
            out = activation(out)
        o_ref[...] = out.astype(o_ref.dtype)

    grid = (n_pad // tile_e,)

    # ---- explicit VMEM budget (double-buffered tiles + weights + headroom) --
    cbytes = jnp.dtype(compute_dtype).itemsize
    obytes = max(jnp.dtype(out_dtype).itemsize, 4)
    edge_tile_bytes = tile_e * (2 * a_pad + e_pad) * cbytes
    out_tile_bytes = tile_e * out_features * obytes
    w_bytes = (2 * a_pad + e_pad) * out_features * cbytes
    vmem_limit = 2 * (edge_tile_bytes + out_tile_bytes + w_bytes) + (4 << 20)
    vmem_limit = int(min(max(vmem_limit, 32 << 20), 100 << 20))

    out = pl.pallas_call(
        kernel,
        out_shape=jax.ShapeDtypeStruct((n_pad, out_features), out_dtype),
        grid_spec=pltpu.PrefetchScalarGridSpec(
            num_scalar_prefetch=0,
            grid=grid,
            in_specs=[
                pl.BlockSpec((tile_e, a_pad), lambda i: (i, 0)),          # h_s
                pl.BlockSpec((tile_e, a_pad), lambda i: (i, 0)),          # h_t
                pl.BlockSpec((tile_e, e_pad), lambda i: (i, 0)),          # m
                pl.BlockSpec((a_pad, out_features), lambda i: (0, 0)),    # W_s
                pl.BlockSpec((a_pad, out_features), lambda i: (0, 0)),    # W_t
                pl.BlockSpec((e_pad, out_features), lambda i: (0, 0)),    # W_m
            ],
            out_specs=pl.BlockSpec((tile_e, out_features), lambda i: (i, 0)),
        ),
        compiler_params=pltpu.CompilerParams(
            dimension_semantics=("parallel",),
            vmem_limit_bytes=vmem_limit,
        ),
    )(h_s, h_t, m_in, W_s, W_t, W_m)

    return out[:n_edges] if pad else out


if __name__ == "__main__":
    # Small shapes consistent with the module (GemNet-OC style, but tiny):
    atom_features = 64
    edge_features = 32
    out_features = 256          # multiple of 128 -> lane-dense output stores
    num_atoms = 32
    num_edges = 500             # ragged on purpose (tiled to 4 x 128 rows)

    key = jax.random.PRNGKey(0)
    k_h, k_m, k_w, k_s, k_t = jax.random.split(key, 5)

    h = jax.random.uniform(k_h, (num_atoms, atom_features), jnp.float32,
                           -1.0, 1.0)
    m = jax.random.uniform(k_m, (num_edges, edge_features), jnp.float32,
                           -1.0, 1.0)
    W = jax.random.uniform(
        k_w, (2 * atom_features + edge_features, out_features), jnp.float32,
        -0.1, 0.1)
    src = jax.random.randint(k_s, (num_edges,), 0, num_atoms, dtype=jnp.int32)
    tgt = jax.random.randint(k_t, (num_edges,), 0, num_atoms, dtype=jnp.int32)
    edge_index = jnp.stack([src, tgt], axis=0)

    out = edge_embedding(h, m, edge_index, W)   # bf16 MXU feed, f32 accumulate
    out = jax.block_until_ready(out)

    # Reference: straightforward JAX translation of the PyTorch forward (f32).
    h_s = h[edge_index[0]]
    h_t = h[edge_index[1]]
    ref = jnp.concatenate([h_s, h_t, m], axis=-1) @ W

    assert out.shape == (num_edges, out_features)
    # bf16 inputs to the MXU -> loosened tolerance vs the pure-f32 reference.
    assert jnp.allclose(out.astype(jnp.float32), ref, atol=5e-2, rtol=5e-2), \
        "mismatch vs reference"

    print("KERNEL_OK")
</pallas_src>

<mosaic_0001>
module attributes {stable_mosaic.version = 11 : i64} {
  func.func @kernel(%arg0: i32, %arg1: memref<128x128xbf16, #tpu.memory_space<vmem>>, %arg2: memref<128x128xbf16, #tpu.memory_space<vmem>>, %arg3: memref<128x128xbf16, #tpu.memory_space<vmem>>, %arg4: memref<128x256xbf16, #tpu.memory_space<vmem>>, %arg5: memref<128x256xbf16, #tpu.memory_space<vmem>>, %arg6: memref<128x256xbf16, #tpu.memory_space<vmem>>, %arg7: memref<128x256xf32, #tpu.memory_space<vmem>>) attributes {dimension_semantics = [#tpu.dimension_semantics<parallel>], iteration_bounds = array<i64: 4>, scalar_prefetch = 0 : i64, scratch_operands = 0 : i64, tpu.core_type = #tpu.core_type<tc>, window_params = [{transform_indices = @transform_0, window_bounds = array<i64: 128, 128>}, {transform_indices = @transform_1, window_bounds = array<i64: 128, 128>}, {transform_indices = @transform_2, window_bounds = array<i64: 128, 128>}, {pipeline_mode = #tpu.pipeline_mode<synchronous>, transform_indices = @transform_3, window_bounds = array<i64: 128, 256>}, {pipeline_mode = #tpu.pipeline_mode<synchronous>, transform_indices = @transform_4, window_bounds = array<i64: 128, 256>}, {pipeline_mode = #tpu.pipeline_mode<synchronous>, transform_indices = @transform_5, window_bounds = array<i64: 128, 256>}, {transform_indices = @transform_6, window_bounds = array<i64: 128, 256>}]} {
    %c0 = arith.constant 0 : index
    %c0_0 = arith.constant 0 : index
    %0 = vector.load %arg1[%c0, %c0_0] : memref<128x128xbf16, #tpu.memory_space<vmem>>, vector<128x128xbf16>
    %c0_1 = arith.constant 0 : index
    %c0_2 = arith.constant 0 : index
    %1 = vector.load %arg4[%c0_1, %c0_2] : memref<128x256xbf16, #tpu.memory_space<vmem>>, vector<128x256xbf16>
    %cst = arith.constant dense<0.000000e+00> : vector<128x256xf32>
    %2 = tpu.matmul %0, %1, %cst {dimension_numbers = #tpu.dot_dimension_numbers<[1], [0], [0], [1], [0, 0, 1, 1], [], []>} : vector<128x128xbf16>, vector<128x256xbf16>, vector<128x256xf32> -> vector<128x256xf32>
    %c0_3 = arith.constant 0 : index
    %c0_4 = arith.constant 0 : index
    %3 = vector.load %arg2[%c0_3, %c0_4] : memref<128x128xbf16, #tpu.memory_space<vmem>>, vector<128x128xbf16>
    %c0_5 = arith.constant 0 : index
    %c0_6 = arith.constant 0 : index
    %4 = vector.load %arg5[%c0_5, %c0_6] : memref<128x256xbf16, #tpu.memory_space<vmem>>, vector<128x256xbf16>
    %cst_7 = arith.constant dense<0.000000e+00> : vector<128x256xf32>
    %5 = tpu.matmul %3, %4, %cst_7 {dimension_numbers = #tpu.dot_dimension_numbers<[1], [0], [0], [1], [0, 0, 1, 1], [], []>} : vector<128x128xbf16>, vector<128x256xbf16>, vector<128x256xf32> -> vector<128x256xf32>
    %6 = arith.addf %2, %5 : vector<128x256xf32>
    %c0_8 = arith.constant 0 : index
    %c0_9 = arith.constant 0 : index
    %7 = vector.load %arg3[%c0_8, %c0_9] : memref<128x128xbf16, #tpu.memory_space<vmem>>, vector<128x128xbf16>
    %c0_10 = arith.constant 0 : index
    %c0_11 = arith.constant 0 : index
    %8 = vector.load %arg6[%c0_10, %c0_11] : memref<128x256xbf16, #tpu.memory_space<vmem>>, vector<128x256xbf16>
    %cst_12 = arith.constant dense<0.000000e+00> : vector<128x256xf32>
    %9 = tpu.matmul %7, %8, %cst_12 {dimension_numbers = #tpu.dot_dimension_numbers<[1], [0], [0], [1], [0, 0, 1, 1], [], []>} : vector<128x128xbf16>, vector<128x256xbf16>, vector<128x256xf32> -> vector<128x256xf32>
    %10 = arith.addf %6, %9 : vector<128x256xf32>
    %c0_13 = arith.constant 0 : index
    %c0_14 = arith.constant 0 : index
    %11 = vector.load %arg7[%c0_13, %c0_14] : memref<128x256xf32, #tpu.memory_space<vmem>>, vector<128x256xf32>
    tpu.vector_store %arg7[%c0_13, %c0_14], %10 {strides = array<i32>} : memref<128x256xf32, #tpu.memory_space<vmem>>, vector<128x256xf32>,
    return
  }
  func.func @transform_0(%arg0: i32) -> (i32, i32) {
    %c0_i32 = arith.constant 0 : i32
    %c0_i32_0 = arith.constant 0 : i32
    return %arg0, %c0_i32 : i32, i32
  }
  func.func @transform_1(%arg0: i32) -> (i32, i32) {
    %c0_i32 = arith.constant 0 : i32
    %c0_i32_0 = arith.constant 0 : i32
    return %arg0, %c0_i32 : i32, i32
  }
  func.func @transform_2(%arg0: i32) -> (i32, i32) {
    %c0_i32 = arith.constant 0 : i32
    %c0_i32_0 = arith.constant 0 : i32
    return %arg0, %c0_i32 : i32, i32
  }
  func.func @transform_3(%arg0: i32) -> (i32, i32) {
    %c0_i32 = arith.constant 0 : i32
    %c0_i32_0 = arith.constant 0 : i32
    %c0_i32_1 = arith.constant 0 : i32
    return %c0_i32, %c0_i32_0 : i32, i32
  }
  func.func @transform_4(%arg0: i32) -> (i32, i32) {
    %c0_i32 = arith.constant 0 : i32
    %c0_i32_0 = arith.constant 0 : i32
    %c0_i32_1 = arith.constant 0 : i32
    return %c0_i32, %c0_i32_0 : i32, i32
  }
  func.func @transform_5(%arg0: i32) -> (i32, i32) {
    %c0_i32 = arith.constant 0 : i32
    %c0_i32_0 = arith.constant 0 : i32
    %c0_i32_1 = arith.constant 0 : i32
    return %c0_i32, %c0_i32_0 : i32, i32
  }
  func.func @transform_6(%arg0: i32) -> (i32, i32) {
    %c0_i32 = arith.constant 0 : i32
    %c0_i32_0 = arith.constant 0 : i32
    return %arg0, %c0_i32 : i32, i32
  }
}

</mosaic_0001>

<llo_original>
// kernel: tpu_custom_call.1
$region0: #{tpu_custom_call.1}
  #allocation0 [shape = 'u32[]', space=smem, size = 0x4, offset = 0x4, fixed_abs, tag = 'smem constant byte address 0x4 - core index']
  #allocation1 [shape = 'u32[72,128]{1,0:T(1,128)}', space=vmem, size = 0x9000, scoped, tag = 'internal scratch']
  %s0 = inlined_call_operand.hbm [shape: bf16[512,128], index: 0, kind: input, shape index: {}]
  %s1 = inlined_call_operand.hbm [shape: bf16[512,128], index: 1, kind: input, shape index: {}]
  %s2 = inlined_call_operand.hbm [shape: bf16[512,128], index: 2, kind: input, shape index: {}]
  %s3 = inlined_call_operand.hbm [shape: bf16[128,256], index: 3, kind: input, shape index: {}]
  %s4 = inlined_call_operand.hbm [shape: bf16[128,256], index: 4, kind: input, shape index: {}]
  %s5 = inlined_call_operand.hbm [shape: bf16[128,256], index: 5, kind: input, shape index: {}]
  %s6 = inlined_call_operand.hbm [shape: f32[512,256], index: 6, kind: output, shape index: {}]
  %s7 = sld [smem:[#allocation0]]
  $region81: #{tpu_custom_call.1} parent=0
    _
  %s9 = ssub.s32 1, %s7
  %s10 = scalar_select 0, %s9, %s7
  $region1: #{tpu_custom_call.1} parent=0
    #allocation2 [shape = 'u8[65536]{0}', space=vmem, size = 0x10000, scoped, tag = 'input window, operand 0']
    #allocation3 [shape = 's32[2]{0}', space=sflag, size = 0x8, scoped, tag = 'scoped memory for tpu_custom_call.1']
    #allocation4 [shape = 's32[2]{0}', space=sflag, size = 0x8, scoped, tag = 'scoped memory for tpu_custom_call.1']
    #allocation5 [shape = 'u8[65536]{0}', space=vmem, size = 0x10000, scoped, tag = 'input window, operand 1']
    #allocation6 [shape = 's32[2]{0}', space=sflag, size = 0x8, scoped, tag = 'scoped memory for tpu_custom_call.1']
    #allocation7 [shape = 'u8[65536]{0}', space=vmem, size = 0x10000, scoped, tag = 'input window, operand 2']
    #allocation8 [shape = 'u8[65536]{0}', space=vmem, size = 0x10000, scoped, tag = 'input window, operand 3, single buffered']
    #allocation9 [shape = 's32[1]{0}', space=sflag, size = 0x4, scoped, tag = 'scoped memory for tpu_custom_call.1']
    #allocation10 [shape = 'u8[65536]{0}', space=vmem, size = 0x10000, scoped, tag = 'input window, operand 4, single buffered']
    #allocation11 [shape = 'u8[65536]{0}', space=vmem, size = 0x10000, scoped, tag = 'input window, operand 5, single buffered']
    #allocation12 [shape = 's32[1]{0}', space=sflag, size = 0x4, scoped, tag = 'scoped memory for tpu_custom_call.1']
    #allocation13 [shape = 'u8[262144]{0}', space=vmem, size = 0x40000, scoped, tag = 'output window, operand 0']
    %11 = vsyncpa [#allocation3], 0
    %s12 = scalar_lea.sflag [#allocation3], 1
    %13 = vsyncpa %s12, 0
    %14 = vsyncpa [#allocation6], 0
    %s15 = scalar_lea.sflag [#allocation6], 1
    %16 = vsyncpa %s15, 0
    %17 = vsyncpa [#allocation9], 0
    %18 = vsyncpa [#allocation12], 0
    %19 = vsyncpa [#allocation4], 0
    %s20 = scalar_lea.sflag [#allocation4], 1
    %21 = vsyncpa %s20, 0
    loop: start=0, step=1, limit=6
    $region2: #{tpu_custom_call.1} parent=1 // loop_pre_header
      _
    $region3: #{tpu_custom_call.1} parent=1 // loop_header
      %s23 = sphi 0, %s27
      %p24 = scmp.ge.s32.totalorder %s23, 6
      %s33 = sphi 0, %s35
      %s36 = sphi 0, %s33
      %s37 = sphi 0, %s36
      %s53 = sphi 0, %s37
      %s59 = sphi 0, %s61
      %s62 = sphi 0, %s59
      %s63 = sphi 0, %s62
      %s79 = sphi 0, %s63
      %s85 = sphi 0, %s87
      %s88 = sphi 0, %s85
      %s89 = sphi 0, %s88
      %s105 = sphi 0, %s89
      %s109 = sphi 0, %s109
      %s111 = sphi 0, %s109
      %s112 = sphi 0, %s111
      %s126 = sphi 0, %s112
      %s130 = sphi 0, %s130
      %s132 = sphi 0, %s130
      %s133 = sphi 0, %s132
      %s147 = sphi 0, %s133
      %s151 = sphi 0, %s151
      %s153 = sphi 0, %s151
      %s154 = sphi 0, %s153
      %s168 = sphi 0, %s154
      %s174 = sphi 0, %s176
      %s177 = sphi 0, %s174
      %s178 = sphi 0, %s177
      %s194 = sphi 0, %s178
    $region4: #{tpu_custom_call.1} parent=1 // loop_header_branch
      %26 = sbr.rel (%p24) target = $region8
    $region5: #{tpu_custom_call.1} parent=1 // loop_body
      %s28 = ssub.s32 %s23, 1
      %s29 = ssub.s32 %s23, 2
      %s30 = sadd.s32 %s23, 1
      %s31 = ssub.s32 %s23, %s30
      %p32 = scmp.eq.s32.totalorder %s31, 0
      %s34 = sadd.s32 %s33, 1
      %s35 = scalar_select %p32, %s33, %s34
      %p38 = pneg %p32
      %p39 = scmp.eq.s32.totalorder %s23, 3
      %p40 = por %p38, %p39
      %p41 = scmp.ne.s32.totalorder %s33, %s36
      %p42 = scmp.eq.s32.totalorder %s23, 0
      %p43 = por %p41, %p42
      %p44 = scmp.ne.s32.totalorder %s33, %s36
      %p45 = scmp.eq.s32.totalorder %s28, 3
      %p46 = por %p44, %p45
      %p47 = scmp.ne.s32.totalorder %s36, %s37
      %p48 = scmp.eq.s32.totalorder %s28, 0
      %p49 = por %p47, %p48
      %p50 = scmp.ne.s32.totalorder %s36, %s37
      %p51 = scmp.eq.s32.totalorder %s29, 3
      %p52 = por %p50, %p51
      %p54 = scmp.ne.s32.totalorder %s37, %s53
      %p55 = scmp.eq.s32.totalorder %s29, 0
      %p56 = por %p54, %p55
      %s57 = ssub.s32 %s23, %s30
      %p58 = scmp.eq.s32.totalorder %s57, 0
      %s60 = sadd.s32 %s59, 1
      %s61 = scalar_select %p58, %s59, %s60
      %p64 = pneg %p58
      %p65 = scmp.eq.s32.totalorder %s23, 3
      %p66 = por %p64, %p65
      %p67 = scmp.ne.s32.totalorder %s59, %s62
      %p68 = scmp.eq.s32.totalorder %s23, 0
      %p69 = por %p67, %p68
      %p70 = scmp.ne.s32.totalorder %s59, %s62
      %p71 = scmp.eq.s32.totalorder %s28, 3
      %p72 = por %p70, %p71
      %p73 = scmp.ne.s32.totalorder %s62, %s63
      %p74 = scmp.eq.s32.totalorder %s28, 0
      %p75 = por %p73, %p74
      %p76 = scmp.ne.s32.totalorder %s62, %s63
      %p77 = scmp.eq.s32.totalorder %s29, 3
      %p78 = por %p76, %p77
      %p80 = scmp.ne.s32.totalorder %s63, %s79
      %p81 = scmp.eq.s32.totalorder %s29, 0
      %p82 = por %p80, %p81
      %s83 = ssub.s32 %s23, %s30
      %p84 = scmp.eq.s32.totalorder %s83, 0
      %s86 = sadd.s32 %s85, 1
      %s87 = scalar_select %p84, %s85, %s86
      %p90 = pneg %p84
      %p91 = scmp.eq.s32.totalorder %s23, 3
      %p92 = por %p90, %p91
      %p93 = scmp.ne.s32.totalorder %s85, %s88
      %p94 = scmp.eq.s32.totalorder %s23, 0
      %p95 = por %p93, %p94
      %p96 = scmp.ne.s32.totalorder %s85, %s88
      %p97 = scmp.eq.s32.totalorder %s28, 3
      %p98 = por %p96, %p97
      %p99 = scmp.ne.s32.totalorder %s88, %s89
      %p100 = scmp.eq.s32.totalorder %s28, 0
      %p101 = por %p99, %p100
      %p102 = scmp.ne.s32.totalorder %s88, %s89
      %p103 = scmp.eq.s32.totalorder %s29, 3
      %p104 = por %p102, %p103
      %p106 = scmp.ne.s32.totalorder %s89, %s105
      %p107 = scmp.eq.s32.totalorder %s29, 0
      %p108 = por %p106, %p107
      %s110 = sadd.s32 %s109, 1
      %p113 = scmp.eq.s32.totalorder %s23, 3
      %p114 = scmp.ne.s32.totalorder %s109, %s111
      %p115 = scmp.eq.s32.totalorder %s23, 0
      %p116 = por %p114, %p115
      %p117 = scmp.ne.s32.totalorder %s109, %s111
      %p118 = scmp.eq.s32.totalorder %s28, 3
      %p119 = por %p117, %p118
      %p120 = scmp.ne.s32.totalorder %s111, %s112
      %p121 = scmp.eq.s32.totalorder %s28, 0
      %p122 = por %p120, %p121
      %p123 = scmp.ne.s32.totalorder %s111, %s112
      %p124 = scmp.eq.s32.totalorder %s29, 3
      %p125 = por %p123, %p124
      %p127 = scmp.ne.s32.totalorder %s112, %s126
      %p128 = scmp.eq.s32.totalorder %s29, 0
      %p129 = por %p127, %p128
      %s131 = sadd.s32 %s130, 1
      %p134 = scmp.eq.s32.totalorder %s23, 3
      %p135 = scmp.ne.s32.totalorder %s130, %s132
      %p136 = scmp.eq.s32.totalorder %s23, 0
      %p137 = por %p135, %p136
      %p138 = scmp.ne.s32.totalorder %s130, %s132
      %p139 = scmp.eq.s32.totalorder %s28, 3
      %p140 = por %p138, %p139
      %p141 = scmp.ne.s32.totalorder %s132, %s133
      %p142 = scmp.eq.s32.totalorder %s28, 0
      %p143 = por %p141, %p142
      %p144 = scmp.ne.s32.totalorder %s132, %s133
      %p145 = scmp.eq.s32.totalorder %s29, 3
      %p146 = por %p144, %p145
      %p148 = scmp.ne.s32.totalorder %s133, %s147
      %p149 = scmp.eq.s32.totalorder %s29, 0
      %p150 = por %p148, %p149
      %s152 = sadd.s32 %s151, 1
      %p155 = scmp.eq.s32.totalorder %s23, 3
      %p156 = scmp.ne.s32.totalorder %s151, %s153
      %p157 = scmp.eq.s32.totalorder %s23, 0
      %p158 = por %p156, %p157
      %p159 = scmp.ne.s32.totalorder %s151, %s153
      %p160 = scmp.eq.s32.totalorder %s28, 3
      %p161 = por %p159, %p160
      %p162 = scmp.ne.s32.totalorder %s153, %s154
      %p163 = scmp.eq.s32.totalorder %s28, 0
      %p164 = por %p162, %p163
      %p165 = scmp.ne.s32.totalorder %s153, %s154
      %p166 = scmp.eq.s32.totalorder %s29, 3
      %p167 = por %p165, %p166
      %p169 = scmp.ne.s32.totalorder %s154, %s168
      %p170 = scmp.eq.s32.totalorder %s29, 0
      %p171 = por %p169, %p170
      %s172 = ssub.s32 %s23, %s30
      %p173 = scmp.eq.s32.totalorder %s172, 0
      %s175 = sadd.s32 %s174, 1
      %s176 = scalar_select %p173, %s174, %s175
      %p179 = pneg %p173
      %p180 = scmp.eq.s32.totalorder %s23, 3
      %p181 = por %p179, %p180
      %p182 = scmp.ne.s32.totalorder %s174, %s177
      %p183 = scmp.eq.s32.totalorder %s23, 0
      %p184 = por %p182, %p183
      %p185 = scmp.ne.s32.totalorder %s174, %s177
      %p186 = scmp.eq.s32.totalorder %s28, 3
      %p187 = por %p185, %p186
      %p188 = scmp.ne.s32.totalorder %s177, %s178
      %p189 = scmp.eq.s32.totalorder %s28, 0
      %p190 = por %p188, %p189
      %p191 = scmp.ne.s32.totalorder %s177, %s178
      %p192 = scmp.eq.s32.totalorder %s29, 3
      %p193 = por %p191, %p192
      %p195 = scmp.ne.s32.totalorder %s178, %s194
      %p196 = scmp.eq.s32.totalorder %s29, 0
      %p197 = por %p195, %p196
      %p198 = scmp.le.s32.totalorder 1, %s23
      %p199 = scmp.lt.s32.totalorder %s23, 5
      %p200 = pnand %p198, %p199
      %p201 = pneg %p200
      // Predicated region
      $region9: #{tpu_custom_call.1} parent=5 // pred_check
        _
      $region10: #{tpu_custom_call.1} parent=5 // pred_check_branch
        %203 = sbr.rel (%p200) target = $region12
      $region11: #{tpu_custom_call.1} parent=5 // pred_region
        %s204 = ssub.s32 %s23, 1
        // Predicated region
        $region13: #{tpu_custom_call.1} parent=11 // pred_check
          %p205 = pneg %p122
        $region14: #{tpu_custom_call.1} parent=11 // pred_check_branch
          %207 = sbr.rel (%p205) target = $region16
        $region15: #{tpu_custom_call.1} parent=11 // pred_region
          %209 = vsyncadd [#allocation9], 0
          %s210 = sshll.u32 %s3, 4
          %s211 = int_to_ptr.hbm [resolvable:$true] %s210
          %s212 = sshll.u32 [#allocation8], 4
          %s213 = int_to_ptr.vmem [resolvable:$true] %s212
          %218 = dma.hbm_to_vmem [thread:$0]  %s211, 2048, %s213, [#allocation9], 128, 128, 8
        $region16: #{tpu_custom_call.1} parent=11 // pred_fallthru
          _
        // Predicated region
        $region17: #{tpu_custom_call.1} parent=11 // pred_check
          %p219 = pneg %p143
        $region18: #{tpu_custom_call.1} parent=11 // pred_check_branch
          %221 = sbr.rel (%p219) target = $region20
        $region19: #{tpu_custom_call.1} parent=11 // pred_region
          %223 = vsyncadd [#allocation9], 0
          %s224 = sshll.u32 %s4, 4
          %s225 = int_to_ptr.hbm [resolvable:$true] %s224
          %s226 = sshll.u32 [#allocation10], 4
          %s227 = int_to_ptr.vmem [resolvable:$true] %s226
          %232 = dma.hbm_to_vmem [thread:$0]  %s225, 2048, %s227, [#allocation9], 128, 128, 8
        $region20: #{tpu_custom_call.1} parent=11 // pred_fallthru
          _
        // Predicated region
        $region21: #{tpu_custom_call.1} parent=11 // pred_check
          %p233 = pneg %p164
        $region22: #{tpu_custom_call.1} parent=11 // pred_check_branch
          %235 = sbr.rel (%p233) target = $region24
        $region23: #{tpu_custom_call.1} parent=11 // pred_region
          %237 = vsyncadd [#allocation12], 0
          %s238 = sshll.u32 %s5, 4
          %s239 = int_to_ptr.hbm [resolvable:$true] %s238
          %s240 = sshll.u32 [#allocation11], 4
          %s241 = int_to_ptr.vmem [resolvable:$true] %s240
          %246 = dma.hbm_to_vmem [thread:$0]  %s239, 2048, %s241, [#allocation12], 128, 128, 8
        $region24: #{tpu_custom_call.1} parent=11 // pred_fallthru
          _
      $region12: #{tpu_custom_call.1} parent=5 // pred_fallthru
        _
      %p247 = scmp.lt.s32.totalorder %s23, 4
      // Predicated region
      $region25: #{tpu_custom_call.1} parent=5 // pred_check
        %p248 = pneg %p247
      $region26: #{tpu_custom_call.1} parent=5 // pred_check_branch
        %250 = sbr.rel (%p248) target = $region28
      $region27: #{tpu_custom_call.1} parent=5 // pred_region
        // Predicated region
        $region29: #{tpu_custom_call.1} parent=27 // pred_check
          %p251 = pneg %p43
        $region30: #{tpu_custom_call.1} parent=27 // pred_check_branch
          %253 = sbr.rel (%p251) target = $region32
        $region31: #{tpu_custom_call.1} parent=27 // pred_region
          %s254 = sand.u32 %s33, 1
          %s255 = scalar_lea.sflag [#allocation3], %s254
          %s256 = sand.u32 %s33, 1
          %s257 = smul.addr %s256, 64
          %s258 = scalar_lea.vmem [#allocation2], %s257
          %s259 = smul.u32 16, %s23
          %261 = vsyncadd %s255, 0
          %s262 = smul.addr %s259, 4
          %s263 = scalar_lea.hbm %s0, %s262
          %s264 = sshll.u32 %s263, 4
          %s265 = int_to_ptr.hbm [resolvable:$true] %s264
          %s266 = sshll.u32 %s258, 4
          %s267 = int_to_ptr.vmem [resolvable:$true] %s266
          %272 = dma.hbm_to_vmem [thread:$0]  %s265, 1024, %s267, %s255, 64, 64, 4
        $region32: #{tpu_custom_call.1} parent=27 // pred_fallthru
          _
        // Predicated region
        $region33: #{tpu_custom_call.1} parent=27 // pred_check
          %p273 = pneg %p69
        $region34: #{tpu_custom_call.1} parent=27 // pred_check_branch
          %275 = sbr.rel (%p273) target = $region36
        $region35: #{tpu_custom_call.1} parent=27 // pred_region
          %s276 = sand.u32 %s23, 1
          %s277 = scalar_lea.sflag [#allocation6], %s276
          %s278 = sand.u32 %s59, 1
          %s279 = smul.addr %s278, 64
          %s280 = scalar_lea.vmem [#allocation5], %s279
          %s281 = smul.u32 16, %s23
          %283 = vsyncadd %s277, 0
          %s284 = smul.addr %s281, 4
          %s285 = scalar_lea.hbm %s1, %s284
          %s286 = sshll.u32 %s285, 4
          %s287 = int_to_ptr.hbm [resolvable:$true] %s286
          %s288 = sshll.u32 %s280, 4
          %s289 = int_to_ptr.vmem [resolvable:$true] %s288
          %294 = dma.hbm_to_vmem [thread:$0]  %s287, 1024, %s289, %s277, 64, 64, 4
        $region36: #{tpu_custom_call.1} parent=27 // pred_fallthru
          _
        // Predicated region
        $region37: #{tpu_custom_call.1} parent=27 // pred_check
          %p295 = pneg %p95
        $region38: #{tpu_custom_call.1} parent=27 // pred_check_branch
          %297 = sbr.rel (%p295) target = $region40
        $region39: #{tpu_custom_call.1} parent=27 // pred_region
          %s298 = sand.u32 %s23, 1
          %s299 = scalar_lea.sflag [#allocation6], %s298
          %s300 = sand.u32 %s85, 1
          %s301 = smul.addr %s300, 64
          %s302 = scalar_lea.vmem [#allocation7], %s301
          %s303 = smul.u32 16, %s23
          %305 = vsyncadd %s299, 0
          %s306 = smul.addr %s303, 4
          %s307 = scalar_lea.hbm %s2, %s306
          %s308 = sshll.u32 %s307, 4
          %s309 = int_to_ptr.hbm [resolvable:$true] %s308
          %s310 = sshll.u32 %s302, 4
          %s311 = int_to_ptr.vmem [resolvable:$true] %s310
          %316 = dma.hbm_to_vmem [thread:$0]  %s309, 1024, %s311, %s299, 64, 64, 4
        $region40: #{tpu_custom_call.1} parent=27 // pred_fallthru
          _
      $region28: #{tpu_custom_call.1} parent=5 // pred_fallthru
        _
      %p317 = scmp.le.s32.totalorder 1, %s23
      %p318 = scmp.lt.s32.totalorder %s23, 5
      %p319 = pnand %p317, %p318
      %p320 = pneg %p319
      // Predicated region
      $region41: #{tpu_custom_call.1} parent=5 // pred_check
        _
      $region42: #{tpu_custom_call.1} parent=5 // pred_check_branch
        %322 = sbr.rel (%p319) target = $region44
      $region43: #{tpu_custom_call.1} parent=5 // pred_region
        %s323 = ssub.s32 %s23, 1
        %s324 = sand.u32 %s36, 1
        %s325 = scalar_lea.sflag [#allocation3], %s324
        %s326 = sand.u32 %s36, 1
        %s327 = smul.addr %s326, 64
        %s328 = scalar_lea.vmem [#allocation2], %s327
        // Predicated region
        $region45: #{tpu_custom_call.1} parent=43 // pred_check
          %p329 = pneg %p49
        $region46: #{tpu_custom_call.1} parent=43 // pred_check_branch
          %331 = sbr.rel (%p329) target = $region48
        $region47: #{tpu_custom_call.1} parent=43 // pred_region
          %333 = dma.done %s325, 1024
        $region48: #{tpu_custom_call.1} parent=43 // pred_fallthru
          _
        %s334 = sand.u32 %s28, 1
        %s335 = scalar_lea.sflag [#allocation6], %s334
        %s336 = sand.u32 %s62, 1
        %s337 = smul.addr %s336, 64
        %s338 = scalar_lea.vmem [#allocation5], %s337
        // Predicated region
        $region49: #{tpu_custom_call.1} parent=43 // pred_check
          %p339 = pneg %p75
        $region50: #{tpu_custom_call.1} parent=43 // pred_check_branch
          %341 = sbr.rel (%p339) target = $region52
        $region51: #{tpu_custom_call.1} parent=43 // pred_region
          %343 = dma.done %s335, 1024
        $region52: #{tpu_custom_call.1} parent=43 // pred_fallthru
          _
        %s344 = sand.u32 %s28, 1
        %s345 = scalar_lea.sflag [#allocation6], %s344
        %s346 = sand.u32 %s88, 1
        %s347 = smul.addr %s346, 64
        %s348 = scalar_lea.vmem [#allocation7], %s347
        // Predicated region
        $region53: #{tpu_custom_call.1} parent=43 // pred_check
          %p349 = pneg %p101
        $region54: #{tpu_custom_call.1} parent=43 // pred_check_branch
          %351 = sbr.rel (%p349) target = $region56
        $region55: #{tpu_custom_call.1} parent=43 // pred_region
          %353 = dma.done %s345, 1024
        $region56: #{tpu_custom_call.1} parent=43 // pred_fallthru
          _
        // Predicated region
        $region57: #{tpu_custom_call.1} parent=43 // pred_check
          %p354 = pneg %p122
        $region58: #{tpu_custom_call.1} parent=43 // pred_check_branch
          %356 = sbr.rel (%p354) target = $region60
        $region59: #{tpu_custom_call.1} parent=43 // pred_region
          %358 = dma.done [#allocation9], 2048
        $region60: #{tpu_custom_call.1} parent=43 // pred_fallthru
          _
        // Predicated region
        $region61: #{tpu_custom_call.1} parent=43 // pred_check
          %p359 = pneg %p143
        $region62: #{tpu_custom_call.1} parent=43 // pred_check_branch
          %361 = sbr.rel (%p359) target = $region64
        $region63: #{tpu_custom_call.1} parent=43 // pred_region
          %363 = dma.done [#allocation9], 2048
        $region64: #{tpu_custom_call.1} parent=43 // pred_fallthru
          _
        // Predicated region
        $region65: #{tpu_custom_call.1} parent=43 // pred_check
          %p364 = pneg %p164
        $region66: #{tpu_custom_call.1} parent=43 // pred_check_branch
          %366 = sbr.rel (%p364) target = $region68
        $region67: #{tpu_custom_call.1} parent=43 // pred_region
          %368 = dma.done [#allocation12], 2048
        $region68: #{tpu_custom_call.1} parent=43 // pred_fallthru
          _
        %s369 = sand.u32 %s36, 1
        %s370 = scalar_lea.sflag [#allocation3], %s369
        %s371 = sand.u32 %s36, 1
        %s372 = smul.addr %s371, 64
        %s373 = scalar_lea.vmem [#allocation2], %s372
        %p374 = pneg %p49
        %p375 = pneg %p46
        %s376 = sand.u32 %s28, 1
        %s377 = scalar_lea.sflag [#allocation6], %s376
        %s378 = sand.u32 %s62, 1
        %s379 = smul.addr %s378, 64
        %s380 = scalar_lea.vmem [#allocation5], %s379
        %p381 = pneg %p75
        %p382 = pneg %p72
        %s383 = sand.u32 %s28, 1
        %s384 = scalar_lea.sflag [#allocation6], %s383
        %s385 = sand.u32 %s88, 1
        %s386 = smul.addr %s385, 64
        %s387 = scalar_lea.vmem [#allocation7], %s386
        %p388 = pneg %p101
        %p389 = pneg %p98
        %p390 = pneg %p122
        %p391 = pneg %p119
        %p392 = pneg %p143
        %p393 = pneg %p140
        %p394 = pneg %p164
        %p395 = pneg %p161
        %p396 = pneg %p190
        %p397 = pneg %p187
        %s398 = sand.u32 %s177, 1
        %s399 = scalar_lea.sflag [#allocation4], %s398
        %s400 = sand.u32 %s177, 1
        %s401 = smul.addr %s400, 256
        %s402 = scalar_lea.vmem [#allocation13], %s401
        %s403 = smul.u32 16, %s28
        %s404 = smul.u32 16, %s28
        %s405 = smul.u32 16, %s28
        %s406 = smul.u32 16, %s28
        %v407 = vld [vmem:[%s328] sm:$0xf]
        %v408 = vld [vmem:[%s328 + $0x4] sm:$0xf]
        %v409 = vld [vmem:[%s328 + $0x8] sm:$0xf]
        %v410 = vld [vmem:[%s328 + $0xc] sm:$0xf]
        %v411 = vld [vmem:[%s328 + $0x10] sm:$0xf]
        %v412 = vld [vmem:[%s328 + $0x14] sm:$0xf]
        %v413 = vld [vmem:[%s328 + $0x18] sm:$0xf]
        %v414 = vld [vmem:[%s328 + $0x1c] sm:$0xf]
        %v415 = vld [vmem:[%s328 + $0x20] sm:$0xf]
        %v416 = vld [vmem:[%s328 + $0x24] sm:$0xf]
        %v417 = vld [vmem:[%s328 + $0x28] sm:$0xf]
        %v418 = vld [vmem:[%s328 + $0x2c] sm:$0xf]
        %v419 = vld [vmem:[%s328 + $0x30] sm:$0xf]
        %v420 = vld [vmem:[%s328 + $0x34] sm:$0xf]
        %v421 = vld [vmem:[%s328 + $0x38] sm:$0xf]
        %v422 = vld [vmem:[%s328 + $0x3c] sm:$0xf]
        %v423 = vld [vmem:[#allocation8] sm:$0xff]
        %v424 = vld [vmem:[#allocation8 + $0x8] sm:$0xff]
        %v425 = vld [vmem:[#allocation8 + $0x10] sm:$0xff]
        %v426 = vld [vmem:[#allocation8 + $0x18] sm:$0xff]
        %v427 = vld [vmem:[#allocation8 + $0x20] sm:$0xff]
        %v428 = vld [vmem:[#allocation8 + $0x28] sm:$0xff]
        %v429 = vld [vmem:[#allocation8 + $0x30] sm:$0xff]
        %v430 = vld [vmem:[#allocation8 + $0x38] sm:$0xff]
        %v431 = vld [vmem:[#allocation8 + $0x40] sm:$0xff]
        %v432 = vld [vmem:[#allocation8 + $0x48] sm:$0xff]
        %v433 = vld [vmem:[#allocation8 + $0x50] sm:$0xff]
        %v434 = vld [vmem:[#allocation8 + $0x58] sm:$0xff]
        %v435 = vld [vmem:[#allocation8 + $0x60] sm:$0xff]
        %v436 = vld [vmem:[#allocation8 + $0x68] sm:$0xff]
        %v437 = vld [vmem:[#allocation8 + $0x70] sm:$0xff]
        %v438 = vld [vmem:[#allocation8 + $0x78] sm:$0xff]
        %v439 = vld [vmem:[%s338] sm:$0xf]
        %v440 = vld [vmem:[%s338 + $0x4] sm:$0xf]
        %v441 = vld [vmem:[%s338 + $0x8] sm:$0xf]
        %v442 = vld [vmem:[%s338 + $0xc] sm:$0xf]
        %v443 = vld [vmem:[%s338 + $0x10] sm:$0xf]
        %v444 = vld [vmem:[%s338 + $0x14] sm:$0xf]
        %v445 = vld [vmem:[%s338 + $0x18] sm:$0xf]
        %v446 = vld [vmem:[%s338 + $0x1c] sm:$0xf]
        %v447 = vld [vmem:[%s338 + $0x20] sm:$0xf]
        %v448 = vld [vmem:[%s338 + $0x24] sm:$0xf]
        %v449 = vld [vmem:[%s338 + $0x28] sm:$0xf]
        %v450 = vld [vmem:[%s338 + $0x2c] sm:$0xf]
        %v451 = vld [vmem:[%s338 + $0x30] sm:$0xf]
        %v452 = vld [vmem:[%s338 + $0x34] sm:$0xf]
        %v453 = vld [vmem:[%s338 + $0x38] sm:$0xf]
        %v454 = vld [vmem:[%s338 + $0x3c] sm:$0xf]
        %v455 = vld [vmem:[#allocation10] sm:$0xff]
        %v456 = vld [vmem:[#allocation10 + $0x8] sm:$0xff]
        %v457 = vld [vmem:[#allocation10 + $0x10] sm:$0xff]
        %v458 = vld [vmem:[#allocation10 + $0x18] sm:$0xff]
        %v459 = vld [vmem:[#allocation10 + $0x20] sm:$0xff]
        %v460 = vld [vmem:[#allocation10 + $0x28] sm:$0xff]
        %v461 = vld [vmem:[#allocation10 + $0x30] sm:$0xff]
        %v462 = vld [vmem:[#allocation10 + $0x38] sm:$0xff]
        %v463 = vld [vmem:[#allocation10 + $0x40] sm:$0xff]
        %v464 = vld [vmem:[#allocation10 + $0x48] sm:$0xff]
        %v465 = vld [vmem:[#allocation10 + $0x50] sm:$0xff]
        %v466 = vld [vmem:[#allocation10 + $0x58] sm:$0xff]
        %v467 = vld [vmem:[#allocation10 + $0x60] sm:$0xff]
        %v468 = vld [vmem:[#allocation10 + $0x68] sm:$0xff]
        %v469 = vld [vmem:[#allocation10 + $0x70] sm:$0xff]
        %v470 = vld [vmem:[#allocation10 + $0x78] sm:$0xff]
        %v487 = vunpack.c.l.b16 %v439
        %v488 = vunpack.c.l.b16 %v440
        %v489 = vunpack.c.l.b16 %v441
        %v490 = vunpack.c.l.b16 %v442
        %v491 = vunpack.c.l.b16 %v443
        %v492 = vunpack.c.l.b16 %v444
        %v493 = vunpack.c.l.b16 %v445
        %v494 = vunpack.c.l.b16 %v446
        %v495 = vunpack.c.l.b16 %v447
        %v496 = vunpack.c.l.b16 %v448
        %v497 = vunpack.c.l.b16 %v449
        %v498 = vunpack.c.l.b16 %v450
        %v499 = vunpack.c.l.b16 %v451
        %v500 = vunpack.c.l.b16 %v452
        %v501 = vunpack.c.l.b16 %v453
        %v502 = vunpack.c.l.b16 %v454
        %v503 = vpack.c.b16 %v488, %v487
        %v504 = vpack.c.b16 %v490, %v489
        %v505 = vpack.c.b16 %v492, %v491
        %v506 = vpack.c.b16 %v494, %v493
        %v507 = vpack.c.b16 %v496, %v495
        %v508 = vpack.c.b16 %v498, %v497
        %v509 = vpack.c.b16 %v500, %v499
        %v510 = vpack.c.b16 %v502, %v501
        %v535 = vunpack.c.l.b16 %v455
        %v536 = vunpack.c.h.b16 %v455
        %v537 = vunpack.c.l.b16 %v456
        %v538 = vunpack.c.h.b16 %v456
        %v539 = vunpack.c.l.b16 %v457
        %v540 = vunpack.c.h.b16 %v457
        %v541 = vunpack.c.l.b16 %v458
        %v542 = vunpack.c.h.b16 %v458
        %v543 = vunpack.c.l.b16 %v459
        %v544 = vunpack.c.h.b16 %v459
        %v545 = vunpack.c.l.b16 %v460
        %v546 = vunpack.c.h.b16 %v460
        %v547 = vunpack.c.l.b16 %v461
        %v548 = vunpack.c.h.b16 %v461
        %v549 = vunpack.c.l.b16 %v462
        %v550 = vunpack.c.h.b16 %v462
        %v551 = vunpack.c.l.b16 %v463
        %v552 = vunpack.c.h.b16 %v463
        %v553 = vunpack.c.l.b16 %v464
        %v554 = vunpack.c.h.b16 %v464
        %v555 = vunpack.c.l.b16 %v465
        %v556 = vunpack.c.h.b16 %v465
        %v557 = vunpack.c.l.b16 %v466
        %v558 = vunpack.c.h.b16 %v466
        %v559 = vunpack.c.l.b16 %v467
        %v560 = vunpack.c.h.b16 %v467
        %v561 = vunpack.c.l.b16 %v468
        %v562 = vunpack.c.h.b16 %v468
        %v563 = vunpack.c.l.b16 %v469
        %v564 = vunpack.c.h.b16 %v469
        %v565 = vunpack.c.l.b16 %v470
        %v566 = vunpack.c.h.b16 %v470
        %v567 = vpack.c.b16 %v537, %v535
        %v568 = vpack.c.b16 %v538, %v536
        %v569 = vpack.c.b16 %v541, %v539
        %v570 = vpack.c.b16 %v542, %v540
        %v571 = vpack.c.b16 %v545, %v543
        %v572 = vpack.c.b16 %v546, %v544
        %v573 = vpack.c.b16 %v549, %v547
        %v574 = vpack.c.b16 %v550, %v548
        %v575 = vpack.c.b16 %v553, %v551
        %v576 = vpack.c.b16 %v554, %v552
        %v577 = vpack.c.b16 %v557, %v555
        %v578 = vpack.c.b16 %v558, %v556
        %v579 = vpack.c.b16 %v561, %v559
        %v580 = vpack.c.b16 %v562, %v560
        %v581 = vpack.c.b16 %v565, %v563
        %v582 = vpack.c.b16 %v566, %v564
        %599 = vmatpush.bf16.msra.mxu0 %v581
        %600 = vmatpush.bf16.msra.mxu0 %v579
        %601 = vmatpush.bf16.msra.mxu0 %v577
        %602 = vmatpush.bf16.msra.mxu0 %v575
        %603 = vmatpush.bf16.msra.mxu0 %v573
        %604 = vmatpush.bf16.msra.mxu0 %v571
        %605 = vmatpush.bf16.msra.mxu0 %v569
        %606 = vmatpush.bf16.msra.mxu0 %v567
        %607 = vmatmul.bf16.gmra.mxu0 %v503
        %v608 = vpop.f32.mrf.mxu0
        %v609 = vadd.f32 0.0, %v608
        %v610 = vpop.f32.mrf.mxu0
        %v611 = vadd.f32 0.0, %v610
        %612 = vmatmul.bf16.gmra.mxu0 %v504
        %v613 = vpop.f32.mrf.mxu0
        %v614 = vadd.f32 0.0, %v613
        %v615 = vpop.f32.mrf.mxu0
        %v616 = vadd.f32 0.0, %v615
        %617 = vmatmul.bf16.gmra.mxu0 %v505
        %v618 = vpop.f32.mrf.mxu0
        %v619 = vadd.f32 0.0, %v618
        %v620 = vpop.f32.mrf.mxu0
        %v621 = vadd.f32 0.0, %v620
        %622 = vmatmul.bf16.gmra.mxu0 %v506
        %v623 = vpop.f32.mrf.mxu0
        %v624 = vadd.f32 0.0, %v623
        %v625 = vpop.f32.mrf.mxu0
        %v626 = vadd.f32 0.0, %v625
        %627 = vmatmul.bf16.gmra.mxu0 %v507
        %v628 = vpop.f32.mrf.mxu0
        %v629 = vadd.f32 0.0, %v628
        %v630 = vpop.f32.mrf.mxu0
        %v631 = vadd.f32 0.0, %v630
        %632 = vmatmul.bf16.gmra.mxu0 %v508
        %v633 = vpop.f32.mrf.mxu0
        %v634 = vadd.f32 0.0, %v633
        %v635 = vpop.f32.mrf.mxu0
        %v636 = vadd.f32 0.0, %v635
        %637 = vmatmul.bf16.gmra.mxu0 %v509
        %v638 = vpop.f32.mrf.mxu0
        %v639 = vadd.f32 0.0, %v638
        %v640 = vpop.f32.mrf.mxu0
        %v641 = vadd.f32 0.0, %v640
        %642 = vmatmul.bf16.gmra.mxu0 %v510
        %v643 = vpop.f32.mrf.mxu0
        %v644 = vadd.f32 0.0, %v643
        %v645 = vpop.f32.mrf.mxu0
        %v646 = vadd.f32 0.0, %v645
        %647 = vdwg.mxu0
        %648 = vmatpush.bf16.msra.mxu0 %v582
        %649 = vmatpush.bf16.msra.mxu0 %v580
        %650 = vmatpush.bf16.msra.mxu0 %v578
        %651 = vmatpush.bf16.msra.mxu0 %v576
        %652 = vmatpush.bf16.msra.mxu0 %v574
        %653 = vmatpush.bf16.msra.mxu0 %v572
        %654 = vmatpush.bf16.msra.mxu0 %v570
        %655 = vmatpush.bf16.msra.mxu0 %v568
        %656 = vmatmul.bf16.gmra.mxu0 %v503
        %v657 = vpop.f32.mrf.mxu0
        %v658 = vadd.f32 0.0, %v657
        %v659 = vpop.f32.mrf.mxu0
        %v660 = vadd.f32 0.0, %v659
        %661 = vmatmul.bf16.gmra.mxu0 %v504
        %v662 = vpop.f32.mrf.mxu0
        %v663 = vadd.f32 0.0, %v662
        %v664 = vpop.f32.mrf.mxu0
        %v665 = vadd.f32 0.0, %v664
        %666 = vmatmul.bf16.gmra.mxu0 %v505
        %v667 = vpop.f32.mrf.mxu0
        %v668 = vadd.f32 0.0, %v667
        %v669 = vpop.f32.mrf.mxu0
        %v670 = vadd.f32 0.0, %v669
        %671 = vmatmul.bf16.gmra.mxu0 %v506
        %v672 = vpop.f32.mrf.mxu0
        %v673 = vadd.f32 0.0, %v672
        %v674 = vpop.f32.mrf.mxu0
        %v675 = vadd.f32 0.0, %v674
        %676 = vmatmul.bf16.gmra.mxu0 %v507
        %v677 = vpop.f32.mrf.mxu0
        %v678 = vadd.f32 0.0, %v677
        %v679 = vpop.f32.mrf.mxu0
        %v680 = vadd.f32 0.0, %v679
        %681 = vmatmul.bf16.gmra.mxu0 %v508
        %v682 = vpop.f32.mrf.mxu0
        %v683 = vadd.f32 0.0, %v682
        %v684 = vpop.f32.mrf.mxu0
        %v685 = vadd.f32 0.0, %v684
        %686 = vmatmul.bf16.gmra.mxu0 %v509
        %v687 = vpop.f32.mrf.mxu0
        %v688 = vadd.f32 0.0, %v687
        %v689 = vpop.f32.mrf.mxu0
        %v690 = vadd.f32 0.0, %v689
        %691 = vmatmul.bf16.gmra.mxu0 %v510
        %v692 = vpop.f32.mrf.mxu0
        %v693 = vadd.f32 0.0, %v692
        %v694 = vpop.f32.mrf.mxu0
        %v695 = vadd.f32 0.0, %v694
        %696 = vdwg.mxu0
        %v713 = vunpack.c.l.b16 %v407
        %v714 = vunpack.c.l.b16 %v408
        %v715 = vunpack.c.l.b16 %v409
        %v716 = vunpack.c.l.b16 %v410
        %v717 = vunpack.c.l.b16 %v411
        %v718 = vunpack.c.l.b16 %v412
        %v719 = vunpack.c.l.b16 %v413
        %v720 = vunpack.c.l.b16 %v414
        %v721 = vunpack.c.l.b16 %v415
        %v722 = vunpack.c.l.b16 %v416
        %v723 = vunpack.c.l.b16 %v417
        %v724 = vunpack.c.l.b16 %v418
        %v725 = vunpack.c.l.b16 %v419
        %v726 = vunpack.c.l.b16 %v420
        %v727 = vunpack.c.l.b16 %v421
        %v728 = vunpack.c.l.b16 %v422
        %v729 = vpack.c.b16 %v714, %v713
        %v730 = vpack.c.b16 %v716, %v715
        %v731 = vpack.c.b16 %v718, %v717
        %v732 = vpack.c.b16 %v720, %v719
        %v733 = vpack.c.b16 %v722, %v721
        %v734 = vpack.c.b16 %v724, %v723
        %v735 = vpack.c.b16 %v726, %v725
        %v736 = vpack.c.b16 %v728, %v727
        %v761 = vunpack.c.l.b16 %v423
        %v762 = vunpack.c.h.b16 %v423
        %v763 = vunpack.c.l.b16 %v424
        %v764 = vunpack.c.h.b16 %v424
        %v765 = vunpack.c.l.b16 %v425
        %v766 = vunpack.c.h.b16 %v425
        %v767 = vunpack.c.l.b16 %v426
        %v768 = vunpack.c.h.b16 %v426
        %v769 = vunpack.c.l.b16 %v427
        %v770 = vunpack.c.h.b16 %v427
        %v771 = vunpack.c.l.b16 %v428
        %v772 = vunpack.c.h.b16 %v428
        %v773 = vunpack.c.l.b16 %v429
        %v774 = vunpack.c.h.b16 %v429
        %v775 = vunpack.c.l.b16 %v430
        %v776 = vunpack.c.h.b16 %v430
        %v777 = vunpack.c.l.b16 %v431
        %v778 = vunpack.c.h.b16 %v431
        %v779 = vunpack.c.l.b16 %v432
        %v780 = vunpack.c.h.b16 %v432
        %v781 = vunpack.c.l.b16 %v433
        %v782 = vunpack.c.h.b16 %v433
        %v783 = vunpack.c.l.b16 %v434
        %v784 = vunpack.c.h.b16 %v434
        %v785 = vunpack.c.l.b16 %v435
        %v786 = vunpack.c.h.b16 %v435
        %v787 = vunpack.c.l.b16 %v436
        %v788 = vunpack.c.h.b16 %v436
        %v789 = vunpack.c.l.b16 %v437
        %v790 = vunpack.c.h.b16 %v437
        %v791 = vunpack.c.l.b16 %v438
        %v792 = vunpack.c.h.b16 %v438
        %v793 = vpack.c.b16 %v763, %v761
        %v794 = vpack.c.b16 %v764, %v762
        %v795 = vpack.c.b16 %v767, %v765
        %v796 = vpack.c.b16 %v768, %v766
        %v797 = vpack.c.b16 %v771, %v769
        %v798 = vpack.c.b16 %v772, %v770
        %v799 = vpack.c.b16 %v775, %v773
        %v800 = vpack.c.b16 %v776, %v774
        %v801 = vpack.c.b16 %v779, %v777
        %v802 = vpack.c.b16 %v780, %v778
        %v803 = vpack.c.b16 %v783, %v781
        %v804 = vpack.c.b16 %v784, %v782
        %v805 = vpack.c.b16 %v787, %v785
        %v806 = vpack.c.b16 %v788, %v786
        %v807 = vpack.c.b16 %v791, %v789
        %v808 = vpack.c.b16 %v792, %v790
        %825 = vmatpush.bf16.msra.mxu0 %v807
        %826 = vmatpush.bf16.msra.mxu0 %v805
        %827 = vmatpush.bf16.msra.mxu0 %v803
        %828 = vmatpush.bf16.msra.mxu0 %v801
        %829 = vmatpush.bf16.msra.mxu0 %v799
        %830 = vmatpush.bf16.msra.mxu0 %v797
        %831 = vmatpush.bf16.msra.mxu0 %v795
        %832 = vmatpush.bf16.msra.mxu0 %v793
        %833 = vmatmul.bf16.gmra.mxu0 %v729
        %v834 = vpop.f32.mrf.mxu0
        %v835 = vadd.f32 %v609, %v834
        %v836 = vpop.f32.mrf.mxu0
        %v837 = vadd.f32 %v611, %v836
        %838 = vmatmul.bf16.gmra.mxu0 %v730
        %v839 = vpop.f32.mrf.mxu0
        %v840 = vadd.f32 %v614, %v839
        %v841 = vpop.f32.mrf.mxu0
        %v842 = vadd.f32 %v616, %v841
        %843 = vmatmul.bf16.gmra.mxu0 %v731
        %v844 = vpop.f32.mrf.mxu0
        %v845 = vadd.f32 %v619, %v844
        %v846 = vpop.f32.mrf.mxu0
        %v847 = vadd.f32 %v621, %v846
        %848 = vmatmul.bf16.gmra.mxu0 %v732
        %v849 = vpop.f32.mrf.mxu0
        %v850 = vadd.f32 %v624, %v849
        %v851 = vpop.f32.mrf.mxu0
        %v852 = vadd.f32 %v626, %v851
        %853 = vmatmul.bf16.gmra.mxu0 %v733
        %v854 = vpop.f32.mrf.mxu0
        %v855 = vadd.f32 %v629, %v854
        %v856 = vpop.f32.mrf.mxu0
        %v857 = vadd.f32 %v631, %v856
        %858 = vmatmul.bf16.gmra.mxu0 %v734
        %v859 = vpop.f32.mrf.mxu0
        %v860 = vadd.f32 %v634, %v859
        %v861 = vpop.f32.mrf.mxu0
        %v862 = vadd.f32 %v636, %v861
        %863 = vmatmul.bf16.gmra.mxu0 %v735
        %v864 = vpop.f32.mrf.mxu0
        %v865 = vadd.f32 %v639, %v864
        %v866 = vpop.f32.mrf.mxu0
        %v867 = vadd.f32 %v641, %v866
        %868 = vmatmul.bf16.gmra.mxu0 %v736
        %v869 = vpop.f32.mrf.mxu0
        %v870 = vadd.f32 %v644, %v869
        %v871 = vpop.f32.mrf.mxu0
        %v872 = vadd.f32 %v646, %v871
        %873 = vdwg.mxu0
        %874 = vmatpush.bf16.msra.mxu0 %v808
        %875 = vmatpush.bf16.msra.mxu0 %v806
        %876 = vmatpush.bf16.msra.mxu0 %v804
        %877 = vmatpush.bf16.msra.mxu0 %v802
        %878 = vmatpush.bf16.msra.mxu0 %v800
        %879 = vmatpush.bf16.msra.mxu0 %v798
        %880 = vmatpush.bf16.msra.mxu0 %v796
        %881 = vmatpush.bf16.msra.mxu0 %v794
        %882 = vmatmul.bf16.gmra.mxu0 %v729
        %v883 = vpop.f32.mrf.mxu0
        %v884 = vadd.f32 %v658, %v883
        %v885 = vpop.f32.mrf.mxu0
        %v886 = vadd.f32 %v660, %v885
        %887 = vmatmul.bf16.gmra.mxu0 %v730
        %v888 = vpop.f32.mrf.mxu0
        %v889 = vadd.f32 %v663, %v888
        %v890 = vpop.f32.mrf.mxu0
        %v891 = vadd.f32 %v665, %v890
        %892 = vmatmul.bf16.gmra.mxu0 %v731
        %v893 = vpop.f32.mrf.mxu0
        %v894 = vadd.f32 %v668, %v893
        %v895 = vpop.f32.mrf.mxu0
        %v896 = vadd.f32 %v670, %v895
        %897 = vmatmul.bf16.gmra.mxu0 %v732
        %v898 = vpop.f32.mrf.mxu0
        %v899 = vadd.f32 %v673, %v898
        %v900 = vpop.f32.mrf.mxu0
        %v901 = vadd.f32 %v675, %v900
        %902 = vmatmul.bf16.gmra.mxu0 %v733
        %v903 = vpop.f32.mrf.mxu0
        %v904 = vadd.f32 %v678, %v903
        %v905 = vpop.f32.mrf.mxu0
        %v906 = vadd.f32 %v680, %v905
        %907 = vmatmul.bf16.gmra.mxu0 %v734
        %v908 = vpop.f32.mrf.mxu0
        %v909 = vadd.f32 %v683, %v908
        %v910 = vpop.f32.mrf.mxu0
        %v911 = vadd.f32 %v685, %v910
        %912 = vmatmul.bf16.gmra.mxu0 %v735
        %v913 = vpop.f32.mrf.mxu0
        %v914 = vadd.f32 %v688, %v913
        %v915 = vpop.f32.mrf.mxu0
        %v916 = vadd.f32 %v690, %v915
        %917 = vmatmul.bf16.gmra.mxu0 %v736
        %v918 = vpop.f32.mrf.mxu0
        %v919 = vadd.f32 %v693, %v918
        %v920 = vpop.f32.mrf.mxu0
        %v921 = vadd.f32 %v695, %v920
        %922 = vdwg.mxu0
        %v923 = vld [vmem:[%s348] sm:$0xf]
        %v924 = vld [vmem:[%s348 + $0x4] sm:$0xf]
        %v925 = vld [vmem:[%s348 + $0x8] sm:$0xf]
        %v926 = vld [vmem:[%s348 + $0xc] sm:$0xf]
        %v927 = vld [vmem:[%s348 + $0x10] sm:$0xf]
        %v928 = vld [vmem:[%s348 + $0x14] sm:$0xf]
        %v929 = vld [vmem:[%s348 + $0x18] sm:$0xf]
        %v930 = vld [vmem:[%s348 + $0x1c] sm:$0xf]
        %v931 = vld [vmem:[%s348 + $0x20] sm:$0xf]
        %v932 = vld [vmem:[%s348 + $0x24] sm:$0xf]
        %v933 = vld [vmem:[%s348 + $0x28] sm:$0xf]
        %v934 = vld [vmem:[%s348 + $0x2c] sm:$0xf]
        %v935 = vld [vmem:[%s348 + $0x30] sm:$0xf]
        %v936 = vld [vmem:[%s348 + $0x34] sm:$0xf]
        %v937 = vld [vmem:[%s348 + $0x38] sm:$0xf]
        %v938 = vld [vmem:[%s348 + $0x3c] sm:$0xf]
        %v939 = vld [vmem:[#allocation11] sm:$0xff]
        %v940 = vld [vmem:[#allocation11 + $0x8] sm:$0xff]
        %v941 = vld [vmem:[#allocation11 + $0x10] sm:$0xff]
        %v942 = vld [vmem:[#allocation11 + $0x18] sm:$0xff]
        %v943 = vld [vmem:[#allocation11 + $0x20] sm:$0xff]
        %v944 = vld [vmem:[#allocation11 + $0x28] sm:$0xff]
        %v945 = vld [vmem:[#allocation11 + $0x30] sm:$0xff]
        %v946 = vld [vmem:[#allocation11 + $0x38] sm:$0xff]
        %v947 = vld [vmem:[#allocation11 + $0x40] sm:$0xff]
        %v948 = vld [vmem:[#allocation11 + $0x48] sm:$0xff]
        %v949 = vld [vmem:[#allocation11 + $0x50] sm:$0xff]
        %v950 = vld [vmem:[#allocation11 + $0x58] sm:$0xff]
        %v951 = vld [vmem:[#allocation11 + $0x60] sm:$0xff]
        %v952 = vld [vmem:[#allocation11 + $0x68] sm:$0xff]
        %v953 = vld [vmem:[#allocation11 + $0x70] sm:$0xff]
        %v954 = vld [vmem:[#allocation11 + $0x78] sm:$0xff]
        %v971 = vunpack.c.l.b16 %v923
        %v972 = vunpack.c.l.b16 %v924
        %v973 = vunpack.c.l.b16 %v925
        %v974 = vunpack.c.l.b16 %v926
        %v975 = vunpack.c.l.b16 %v927
        %v976 = vunpack.c.l.b16 %v928
        %v977 = vunpack.c.l.b16 %v929
        %v978 = vunpack.c.l.b16 %v930
        %v979 = vunpack.c.l.b16 %v931
        %v980 = vunpack.c.l.b16 %v932
        %v981 = vunpack.c.l.b16 %v933
        %v982 = vunpack.c.l.b16 %v934
        %v983 = vunpack.c.l.b16 %v935
        %v984 = vunpack.c.l.b16 %v936
        %v985 = vunpack.c.l.b16 %v937
        %v986 = vunpack.c.l.b16 %v938
        %v987 = vpack.c.b16 %v972, %v971
        %v988 = vpack.c.b16 %v974, %v973
        %v989 = vpack.c.b16 %v976, %v975
        %v990 = vpack.c.b16 %v978, %v977
        %v991 = vpack.c.b16 %v980, %v979
        %v992 = vpack.c.b16 %v982, %v981
        %v993 = vpack.c.b16 %v984, %v983
        %v994 = vpack.c.b16 %v986, %v985
        %v1019 = vunpack.c.l.b16 %v939
        %v1020 = vunpack.c.h.b16 %v939
        %v1021 = vunpack.c.l.b16 %v940
        %v1022 = vunpack.c.h.b16 %v940
        %v1023 = vunpack.c.l.b16 %v941
        %v1024 = vunpack.c.h.b16 %v941
        %v1025 = vunpack.c.l.b16 %v942
        %v1026 = vunpack.c.h.b16 %v942
        %v1027 = vunpack.c.l.b16 %v943
        %v1028 = vunpack.c.h.b16 %v943
        %v1029 = vunpack.c.l.b16 %v944
        %v1030 = vunpack.c.h.b16 %v944
        %v1031 = vunpack.c.l.b16 %v945
        %v1032 = vunpack.c.h.b16 %v945
        %v1033 = vunpack.c.l.b16 %v946
        %v1034 = vunpack.c.h.b16 %v946
        %v1035 = vunpack.c.l.b16 %v947
        %v1036 = vunpack.c.h.b16 %v947
        %v1037 = vunpack.c.l.b16 %v948
        %v1038 = vunpack.c.h.b16 %v948
        %v1039 = vunpack.c.l.b16 %v949
        %v1040 = vunpack.c.h.b16 %v949
        %v1041 = vunpack.c.l.b16 %v950
        %v1042 = vunpack.c.h.b16 %v950
        %v1043 = vunpack.c.l.b16 %v951
        %v1044 = vunpack.c.h.b16 %v951
        %v1045 = vunpack.c.l.b16 %v952
        %v1046 = vunpack.c.h.b16 %v952
        %v1047 = vunpack.c.l.b16 %v953
        %v1048 = vunpack.c.h.b16 %v953
        %v1049 = vunpack.c.l.b16 %v954
        %v1050 = vunpack.c.h.b16 %v954
        %v1051 = vpack.c.b16 %v1021, %v1019
        %v1052 = vpack.c.b16 %v1022, %v1020
        %v1053 = vpack.c.b16 %v1025, %v1023
        %v1054 = vpack.c.b16 %v1026, %v1024
        %v1055 = vpack.c.b16 %v1029, %v1027
        %v1056 = vpack.c.b16 %v1030, %v1028
        %v1057 = vpack.c.b16 %v1033, %v1031
        %v1058 = vpack.c.b16 %v1034, %v1032
        %v1059 = vpack.c.b16 %v1037, %v1035
        %v1060 = vpack.c.b16 %v1038, %v1036
        %v1061 = vpack.c.b16 %v1041, %v1039
        %v1062 = vpack.c.b16 %v1042, %v1040
        %v1063 = vpack.c.b16 %v1045, %v1043
        %v1064 = vpack.c.b16 %v1046, %v1044
        %v1065 = vpack.c.b16 %v1049, %v1047
        %v1066 = vpack.c.b16 %v1050, %v1048
        %1083 = vmatpush.bf16.msra.mxu0 %v1065
        %1084 = vmatpush.bf16.msra.mxu0 %v1063
        %1085 = vmatpush.bf16.msra.mxu0 %v1061
        %1086 = vmatpush.bf16.msra.mxu0 %v1059
        %1087 = vmatpush.bf16.msra.mxu0 %v1057
        %1088 = vmatpush.bf16.msra.mxu0 %v1055
        %1089 = vmatpush.bf16.msra.mxu0 %v1053
        %1090 = vmatpush.bf16.msra.mxu0 %v1051
        %1091 = vmatmul.bf16.gmra.mxu0 %v987
        %v1092 = vpop.f32.mrf.mxu0
        %v1093 = vadd.f32 0.0, %v1092
        %v1094 = vpop.f32.mrf.mxu0
        %v1095 = vadd.f32 0.0, %v1094
        %1096 = vmatmul.bf16.gmra.mxu0 %v988
        %v1097 = vpop.f32.mrf.mxu0
        %v1098 = vadd.f32 0.0, %v1097
        %v1099 = vpop.f32.mrf.mxu0
        %v1100 = vadd.f32 0.0, %v1099
        %1101 = vmatmul.bf16.gmra.mxu0 %v989
        %v1102 = vpop.f32.mrf.mxu0
        %v1103 = vadd.f32 0.0, %v1102
        %v1104 = vpop.f32.mrf.mxu0
        %v1105 = vadd.f32 0.0, %v1104
        %1106 = vmatmul.bf16.gmra.mxu0 %v990
        %v1107 = vpop.f32.mrf.mxu0
        %v1108 = vadd.f32 0.0, %v1107
        %v1109 = vpop.f32.mrf.mxu0
        %v1110 = vadd.f32 0.0, %v1109
        %1111 = vmatmul.bf16.gmra.mxu0 %v991
        %v1112 = vpop.f32.mrf.mxu0
        %v1113 = vadd.f32 0.0, %v1112
        %v1114 = vpop.f32.mrf.mxu0
        %v1115 = vadd.f32 0.0, %v1114
        %1116 = vmatmul.bf16.gmra.mxu0 %v992
        %v1117 = vpop.f32.mrf.mxu0
        %v1118 = vadd.f32 0.0, %v1117
        %v1119 = vpop.f32.mrf.mxu0
        %v1120 = vadd.f32 0.0, %v1119
        %1121 = vmatmul.bf16.gmra.mxu0 %v993
        %v1122 = vpop.f32.mrf.mxu0
        %v1123 = vadd.f32 0.0, %v1122
        %v1124 = vpop.f32.mrf.mxu0
        %v1125 = vadd.f32 0.0, %v1124
        %1126 = vmatmul.bf16.gmra.mxu0 %v994
        %v1127 = vpop.f32.mrf.mxu0
        %v1128 = vadd.f32 0.0, %v1127
        %v1129 = vpop.f32.mrf.mxu0
        %v1130 = vadd.f32 0.0, %v1129
        %1131 = vdwg.mxu0
        %1132 = vmatpush.bf16.msra.mxu0 %v1066
        %1133 = vmatpush.bf16.msra.mxu0 %v1064
        %1134 = vmatpush.bf16.msra.mxu0 %v1062
        %1135 = vmatpush.bf16.msra.mxu0 %v1060
        %1136 = vmatpush.bf16.msra.mxu0 %v1058
        %1137 = vmatpush.bf16.msra.mxu0 %v1056
        %1138 = vmatpush.bf16.msra.mxu0 %v1054
        %1139 = vmatpush.bf16.msra.mxu0 %v1052
        %1140 = vmatmul.bf16.gmra.mxu0 %v987
        %v1141 = vpop.f32.mrf.mxu0
        %v1142 = vadd.f32 0.0, %v1141
        %v1143 = vpop.f32.mrf.mxu0
        %v1144 = vadd.f32 0.0, %v1143
        %1145 = vmatmul.bf16.gmra.mxu0 %v988
        %v1146 = vpop.f32.mrf.mxu0
        %v1147 = vadd.f32 0.0, %v1146
        %v1148 = vpop.f32.mrf.mxu0
        %v1149 = vadd.f32 0.0, %v1148
        %1150 = vmatmul.bf16.gmra.mxu0 %v989
        %v1151 = vpop.f32.mrf.mxu0
        %v1152 = vadd.f32 0.0, %v1151
        %v1153 = vpop.f32.mrf.mxu0
        %v1154 = vadd.f32 0.0, %v1153
        %1155 = vmatmul.bf16.gmra.mxu0 %v990
        %v1156 = vpop.f32.mrf.mxu0
        %v1157 = vadd.f32 0.0, %v1156
        %v1158 = vpop.f32.mrf.mxu0
        %v1159 = vadd.f32 0.0, %v1158
        %1160 = vmatmul.bf16.gmra.mxu0 %v991
        %v1161 = vpop.f32.mrf.mxu0
        %v1162 = vadd.f32 0.0, %v1161
        %v1163 = vpop.f32.mrf.mxu0
        %v1164 = vadd.f32 0.0, %v1163
        %1165 = vmatmul.bf16.gmra.mxu0 %v992
        %v1166 = vpop.f32.mrf.mxu0
        %v1167 = vadd.f32 0.0, %v1166
        %v1168 = vpop.f32.mrf.mxu0
        %v1169 = vadd.f32 0.0, %v1168
        %1170 = vmatmul.bf16.gmra.mxu0 %v993
        %v1171 = vpop.f32.mrf.mxu0
        %v1172 = vadd.f32 0.0, %v1171
        %v1173 = vpop.f32.mrf.mxu0
        %v1174 = vadd.f32 0.0, %v1173
        %1175 = vmatmul.bf16.gmra.mxu0 %v994
        %v1176 = vpop.f32.mrf.mxu0
        %v1177 = vadd.f32 0.0, %v1176
        %v1178 = vpop.f32.mrf.mxu0
        %v1179 = vadd.f32 0.0, %v1178
        %1180 = vdwg.mxu0
        %v1181 = vadd.f32 %v835, %v1093
        %v1182 = vadd.f32 %v884, %v1142
        %v1183 = vadd.f32 %v837, %v1095
        %v1184 = vadd.f32 %v886, %v1144
        %v1185 = vadd.f32 %v840, %v1098
        %v1186 = vadd.f32 %v889, %v1147
        %v1187 = vadd.f32 %v842, %v1100
        %v1188 = vadd.f32 %v891, %v1149
        %v1189 = vadd.f32 %v845, %v1103
        %v1190 = vadd.f32 %v894, %v1152
        %v1191 = vadd.f32 %v847, %v1105
        %v1192 = vadd.f32 %v896, %v1154
        %v1193 = vadd.f32 %v850, %v1108
        %v1194 = vadd.f32 %v899, %v1157
        %v1195 = vadd.f32 %v852, %v1110
        %v1196 = vadd.f32 %v901, %v1159
        %v1197 = vadd.f32 %v855, %v1113
        %v1198 = vadd.f32 %v904, %v1162
        %v1199 = vadd.f32 %v857, %v1115
        %v1200 = vadd.f32 %v906, %v1164
        %v1201 = vadd.f32 %v860, %v1118
        %v1202 = vadd.f32 %v909, %v1167
        %v1203 = vadd.f32 %v862, %v1120
        %v1204 = vadd.f32 %v911, %v1169
        %v1205 = vadd.f32 %v865, %v1123
        %v1206 = vadd.f32 %v914, %v1172
        %v1207 = vadd.f32 %v867, %v1125
        %v1208 = vadd.f32 %v916, %v1174
        %v1209 = vadd.f32 %v870, %v1128
        %v1210 = vadd.f32 %v919, %v1177
        %v1211 = vadd.f32 %v872, %v1130
        %v1212 = vadd.f32 %v921, %v1179
        %1213 = vst [vmem:[%s402] sm:$0xff] %v1181
        %1214 = vst [vmem:[%s402 + $0x8] sm:$0xff] %v1182
        %1215 = vst [vmem:[%s402 + $0x10] sm:$0xff] %v1183
        %1216 = vst [vmem:[%s402 + $0x18] sm:$0xff] %v1184
        %1217 = vst [vmem:[%s402 + $0x20] sm:$0xff] %v1185
        %1218 = vst [vmem:[%s402 + $0x28] sm:$0xff] %v1186
        %1219 = vst [vmem:[%s402 + $0x30] sm:$0xff] %v1187
        %1220 = vst [vmem:[%s402 + $0x38] sm:$0xff] %v1188
        %1221 = vst [vmem:[%s402 + $0x40] sm:$0xff] %v1189
        %1222 = vst [vmem:[%s402 + $0x48] sm:$0xff] %v1190
        %1223 = vst [vmem:[%s402 + $0x50] sm:$0xff] %v1191
        %1224 = vst [vmem:[%s402 + $0x58] sm:$0xff] %v1192
        %1225 = vst [vmem:[%s402 + $0x60] sm:$0xff] %v1193
        %1226 = vst [vmem:[%s402 + $0x68] sm:$0xff] %v1194
        %1227 = vst [vmem:[%s402 + $0x70] sm:$0xff] %v1195
        %1228 = vst [vmem:[%s402 + $0x78] sm:$0xff] %v1196
        %1229 = vst [vmem:[%s402 + $0x80] sm:$0xff] %v1197
        %1230 = vst [vmem:[%s402 + $0x88] sm:$0xff] %v1198
        %1231 = vst [vmem:[%s402 + $0x90] sm:$0xff] %v1199
        %1232 = vst [vmem:[%s402 + $0x98] sm:$0xff] %v1200
        %1233 = vst [vmem:[%s402 + $0xa0] sm:$0xff] %v1201
        %1234 = vst [vmem:[%s402 + $0xa8] sm:$0xff] %v1202
        %1235 = vst [vmem:[%s402 + $0xb0] sm:$0xff] %v1203
        %1236 = vst [vmem:[%s402 + $0xb8] sm:$0xff] %v1204
        %1237 = vst [vmem:[%s402 + $0xc0] sm:$0xff] %v1205
        %1238 = vst [vmem:[%s402 + $0xc8] sm:$0xff] %v1206
        %1239 = vst [vmem:[%s402 + $0xd0] sm:$0xff] %v1207
        %1240 = vst [vmem:[%s402 + $0xd8] sm:$0xff] %v1208
        %1241 = vst [vmem:[%s402 + $0xe0] sm:$0xff] %v1209
        %1242 = vst [vmem:[%s402 + $0xe8] sm:$0xff] %v1210
        %1243 = vst [vmem:[%s402 + $0xf0] sm:$0xff] %v1211
        %1244 = vst [vmem:[%s402 + $0xf8] sm:$0xff] %v1212
        %s1245 = sand.u32 %s177, 1
        %s1246 = scalar_lea.sflag [#allocation4], %s1245
        %s1247 = sand.u32 %s177, 1
        %s1248 = smul.addr %s1247, 256
        %s1249 = scalar_lea.vmem [#allocation13], %s1248
        // Predicated region
        $region69: #{tpu_custom_call.1} parent=43 // pred_check
          %p1250 = pneg %p187
        $region70: #{tpu_custom_call.1} parent=43 // pred_check_branch
          %1252 = sbr.rel (%p1250) target = $region72
        $region71: #{tpu_custom_call.1} parent=43 // pred_region
          %s1253 = smul.u32 16, %s28
          %1255 = vsyncadd %s1246, 0
          %s1256 = smul.addr %s1253, 2
          %s1257 = smul.addr %s1256, 8
          %s1258 = scalar_lea.hbm %s6, %s1257
          %s1259 = sshll.u32 %s1249, 4
          %s1260 = int_to_ptr.vmem [resolvable:$true] %s1259
          %s1261 = sshll.u32 %s1258, 4
          %s1262 = int_to_ptr.hbm [resolvable:$true] %s1261
          %1267 = dma.vmem_to_hbm [thread:$0]  %s1260, 4096, %s1262, %s1246, 256, 256, 16
        $region72: #{tpu_custom_call.1} parent=43 // pred_fallthru
          _
      $region44: #{tpu_custom_call.1} parent=5 // pred_fallthru
        _
      %p1268 = scmp.le.s32.totalorder 2, %s23
      // Predicated region
      $region73: #{tpu_custom_call.1} parent=5 // pred_check
        %p1269 = pneg %p1268
      $region74: #{tpu_custom_call.1} parent=5 // pred_check_branch
        %1271 = sbr.rel (%p1269) target = $region76
      $region75: #{tpu_custom_call.1} parent=5 // pred_region
        %s1272 = ssub.s32 %s23, 2
        // Predicated region
        $region77: #{tpu_custom_call.1} parent=75 // pred_check
          %p1273 = pneg %p193
        $region78: #{tpu_custom_call.1} parent=75 // pred_check_branch
          %1275 = sbr.rel (%p1273) target = $region80
        $region79: #{tpu_custom_call.1} parent=75 // pred_region
          %s1276 = sand.u32 %s178, 1
          %s1277 = scalar_lea.sflag [#allocation4], %s1276
          %s1278 = sand.u32 %s178, 1
          %s1279 = smul.addr %s1278, 256
          %s1280 = scalar_lea.vmem [#allocation13], %s1279
          %1282 = dma.done %s1277, 4096
        $region80: #{tpu_custom_call.1} parent=75 // pred_fallthru
          _
      $region76: #{tpu_custom_call.1} parent=5 // pred_fallthru
        _
    $region6: #{tpu_custom_call.1} parent=1 // loop_footer
      %s27 = sadd.s32 1, %s23
    $region7: #{tpu_custom_call.1} parent=1 // loop_footer_branch
      %22 = sbr.rel target = $region3
    $region8: #{tpu_custom_call.1} parent=1 // loop_exit
      _
    %1283 = vsyncpa [#allocation3], 1
    %s1284 = scalar_lea.sflag [#allocation3], 1
    %1285 = vsyncpa %s1284, 1
    %1286 = vsyncpa [#allocation6], 1
    %s1287 = scalar_lea.sflag [#allocation6], 1
    %1288 = vsyncpa %s1287, 1
    %1289 = vsyncpa [#allocation9], 1
    %1290 = vsyncpa [#allocation12], 1
    %1291 = vsyncpa [#allocation4], 1
    %s1292 = scalar_lea.sflag [#allocation4], 1
    %1293 = vsyncpa %s1292, 1

</llo_original>
